<compile_context>
chip_gen: v7x
topology: tpu7x:2x2x1
jax: 0.10.0
libtpu: 0.0.40
codegen_flags: <defaults>
</compile_context>

<pallas_src>
from functools import partial

import jax
import jax.numpy as jnp
from jax.experimental import pallas as pl
from jax.experimental.pallas import tpu as pltpu

LANES = 128                        # f32 lanes per vreg row (same on v5e/v6e/v7x)
_TINY_ELEMS = 16_384               # below this, let XLA fuse it (overhead-bound)
_TARGET_TILE_BYTES = 4 * 1024 * 1024   # ~4 MiB input buffer per grid step
_MIN_TILE_BYTES = 1 * 1024 * 1024      # never shrink tiles below ~1 MiB for step count
_MAX_PACK_D = 64                   # cap selector size for the wide path


# --------------------------------------------------------------------------
# Kernels
# --------------------------------------------------------------------------
def _wide_norm_kernel(x_ref, sel_ref, o_ref, *, bf16_fast: bool):
    """x_ref: (tm, 128*D) wide-packed capsules; sel_ref: (128*D, 128) bf16 0/1
    block-diagonal selector; o_ref: (tm, 128) lane-dense capsule norms."""
    sel = sel_ref[...]                       # bf16, exact 0/1 values
    x = x_ref[...]
    if bf16_fast:
        # bf16 VPU square (native on v6e/v7x) + ONE bf16 MXU pass, f32 accumulate.
        sq = x * x
        ssum = jnp.dot(sq, sel, preferred_element_type=jnp.float32)
    else:
        # f32-accurate path without multi-pass f32 matmuls: Dekker-style split of
        # the squared values into hi/lo bf16, two single-pass bf16 MXU matmuls,
        # f32 accumulation.  Relative error <= ~2^-16 on the sum of squares.
        xf = x.astype(jnp.float32)
        sq = xf * xf
        hi = sq.astype(jnp.bfloat16)
        lo = (sq - hi.astype(jnp.float32)).astype(jnp.bfloat16)
        ssum = (jnp.dot(hi, sel, preferred_element_type=jnp.float32) +
                jnp.dot(lo, sel, preferred_element_type=jnp.float32))
    o_ref[...] = jnp.sqrt(ssum).astype(o_ref.dtype)   # sqrt on the EUP


def _rows_norm_kernel(x_ref, o_ref):
    """Fallback path. x_ref: (tm, D); o_ref: (tm, 1)."""
    x = x_ref[...].astype(jnp.float32)
    o_ref[...] = jnp.sqrt(jnp.sum(x * x, axis=-1, keepdims=True)).astype(o_ref.dtype)


# --------------------------------------------------------------------------
# Helpers
# --------------------------------------------------------------------------
def _vmem_limit_bytes():
    """Generation-aware scoped-VMEM limit with a safe fallback."""
    try:
        cap = int(pltpu.get_tpu_info().vmem_capacity_bytes)
    except Exception:
        cap = 64 * 1024 * 1024          # conservative (v7x physical)
    return max(32 * 1024 * 1024, min(3 * cap // 4, 96 * 1024 * 1024))


def _pick_rows(total_rows, row_bytes, sublane, override=None):
    """Rows per grid step: ~4 MiB tiles, >= ~1 MiB tiles, prefer >= 8 steps."""
    if override is not None:
        rows = int(override)
    else:
        tgt = max(1, _TARGET_TILE_BYTES // row_bytes)
        flo = max(1, _MIN_TILE_BYTES // row_bytes)
        rows = min(tgt, pl.cdiv(total_rows, 8))   # keep >= 8 steps (v7x megacore)
        rows = max(rows, flo)                     # ...but never tiny tiles
    rows = max(1, min(rows, total_rows))
    if rows < total_rows:
        # Non-full blocks must keep sublane alignment (8 f32 / 16 bf16).
        rows = max(sublane, (rows // sublane) * sublane)
        rows = min(rows, total_rows)
    return rows


def _sublane(dtype):
    return 16 if dtype in (jnp.bfloat16, jnp.float16) else 8


# --------------------------------------------------------------------------
# Wrappers
# --------------------------------------------------------------------------
def _norm_wide(x, block_rows):
    """Lane-dense wide-packed path: requires N % 128 == 0 (any D <= _MAX_PACK_D)."""
    B, C, D = x.shape
    N = B * C
    M2 = N // LANES                  # wide rows; each holds 128 whole capsules
    K = LANES * D                    # lanes per wide row (always a 128-multiple)
    xw = x.reshape(M2, K)            # free, contiguous row-major reshape

    # Block-diagonal selector: sel[k, l] = 1 iff lane k belongs to capsule l of
    # its wide row.  Exact in bf16 (0/1) -> keeps every MXU matmul single-pass.
    sel = (jax.lax.broadcasted_iota(jnp.int32, (K, LANES), 0) // D ==
           jax.lax.broadcasted_iota(jnp.int32, (K, LANES), 1)).astype(jnp.bfloat16)

    tm = _pick_rows(M2, K * x.dtype.itemsize, _sublane(x.dtype), block_rows)
    grid = (pl.cdiv(M2, tm),)

    kernel = partial(_wide_norm_kernel, bf16_fast=(x.dtype == jnp.bfloat16))

    out2d = pl.pallas_call(
        kernel,
        out_shape=jax.ShapeDtypeStruct((M2, LANES), x.dtype),
        grid=grid,
        in_specs=[
            pl.BlockSpec((tm, K), lambda i: (i, 0)),
            pl.BlockSpec((K, LANES), lambda i: (0, 0)),   # resident constant selector
        ],
        out_specs=pl.BlockSpec((tm, LANES), lambda i: (i, 0)),  # lane-dense output
        compiler_params=pltpu.CompilerParams(
            dimension_semantics=("parallel",),   # v7x: both TCs share the row grid
            vmem_limit_bytes=_vmem_limit_bytes(),
        ),
        cost_estimate=pl.CostEstimate(
            flops=2 * N * D * LANES + 3 * N * D,     # selector matmul + elementwise
            transcendentals=N,
            bytes_accessed=(x.size + N) * x.dtype.itemsize + sel.size * 2,
        ),
    )(xw, sel)
    # out2d[R, l] is capsule n = 128*R + l -> row-major reshape recovers (B, C).
    return out2d.reshape(B, C)


def _norm_rows(x, block_rows):
    """General fallback: row-tiled (N, D) reduction over lanes."""
    B, C, D = x.shape
    N = B * C
    x2 = x.reshape(N, D)
    padded_row_bytes = pl.cdiv(D, LANES) * LANES * x.dtype.itemsize
    tm = _pick_rows(N, padded_row_bytes, _sublane(x.dtype), block_rows)
    grid = (pl.cdiv(N, tm),)

    out = pl.pallas_call(
        _rows_norm_kernel,
        out_shape=jax.ShapeDtypeStruct((N, 1), x.dtype),
        grid=grid,
        in_specs=[pl.BlockSpec((tm, D), lambda i: (i, 0))],
        out_specs=pl.BlockSpec((tm, 1), lambda i: (i, 0)),
        compiler_params=pltpu.CompilerParams(
            dimension_semantics=("parallel",),
            vmem_limit_bytes=_vmem_limit_bytes(),
        ),
        cost_estimate=pl.CostEstimate(
            flops=3 * N * D,
            transcendentals=N,
            bytes_accessed=(x.size + N) * x.dtype.itemsize,
        ),
    )(x2)
    return out.reshape(B, C)


def _norm_xla(x):
    out_dtype = x.dtype if jnp.issubdtype(x.dtype, jnp.floating) else jnp.float32
    return jnp.sqrt(jnp.sum(jnp.square(x.astype(jnp.float32)), axis=2)).astype(out_dtype)


def caps_to_scalars(x, *, block_rows=None):
    """CapsToScalars.forward: L2 norm over axis 2 (== torch.norm(x, dim=2))."""
    if x.ndim != 3 or not jnp.issubdtype(x.dtype, jnp.floating):
        # TODO(synk): >3-D or non-float inputs are handled by plain XLA, not Pallas.
        return _norm_xla(x)
    B, C, D = x.shape
    N = B * C
    if N == 0 or D == 0:
        return jnp.zeros((B, C), x.dtype)
    if N * D < _TINY_ELEMS:
        # Kernel launch + per-grid-step overhead dwarfs the work; let XLA fuse.
        return _norm_xla(x)
    if (N % LANES == 0 and 1 <= D <= _MAX_PACK_D
            and x.dtype in (jnp.float32, jnp.bfloat16, jnp.float16)):
        return _norm_wide(x, block_rows)
    return _norm_rows(x, block_rows)


# --------------------------------------------------------------------------
# Self-test
# --------------------------------------------------------------------------
def _check(name, out, x, atol=1e-5, rtol=2e-5):
    out = jax.block_until_ready(out)
    ref = jnp.sqrt(jnp.sum(jnp.square(x.astype(jnp.float32)), axis=2))
    assert out.shape == x.shape[:2], (name, out.shape)
    assert out.dtype == x.dtype, (name, out.dtype)
    ok = jnp.allclose(out.astype(jnp.float32), ref, atol=atol, rtol=rtol)
    assert bool(ok), f"{name}: mismatch vs reference"


if __name__ == "__main__":
    key = jax.random.PRNGKey(0)
    k1, k2, k3, k4, k5 = jax.random.split(key, 5)

    # 1) Tiny digit-caps shape -> XLA bypass path (dispatcher).
    x_tiny = jax.random.normal(k1, (2, 10, 16), dtype=jnp.float32)
    _check("tiny/xla", caps_to_scalars(x_tiny), x_tiny)

    # 2) Primary-caps shape (batch=2, 1152 capsules of dim 8) -> wide kernel.
    x_caps = jax.random.normal(k2, (2, 1152, 8), dtype=jnp.float32)
    _check("wide/1step", caps_to_scalars(x_caps), x_caps)

    # 3) Same input, forced small tile -> multi-step grid + partial last block.
    _check("wide/3step", caps_to_scalars(x_caps, block_rows=8), x_caps)

    # 4) Larger shape, D=16 -> wide kernel with auto tile sizing.
    x_big = jax.random.normal(k3, (4, 4096, 16), dtype=jnp.float32)
    _check("wide/big", caps_to_scalars(x_big), x_big)

    # 5) D=20 (not a power of two) still takes the wide lane-dense kernel.
    x_d20 = jax.random.normal(k4, (2, 512, 20), dtype=jnp.float32)
    _check("wide/d20", caps_to_scalars(x_d20), x_d20)

    # 6) N not divisible by 128 -> row-tiled fallback kernel (single + gridded).
    x_odd = jax.random.normal(k5, (2, 500, 20), dtype=jnp.float32)
    _check("rows/full", caps_to_scalars(x_odd), x_odd)
    _check("rows/grid", caps_to_scalars(x_odd, block_rows=256), x_odd)

    # 7) bf16 input: bf16 VPU squares, single-pass bf16 MXU, f32 accumulate.
    x_bf16 = x_caps.astype(jnp.bfloat16)
    _check("wide/bf16", caps_to_scalars(x_bf16), x_bf16, atol=3e-2, rtol=3e-2)

    print("KERNEL_OK")
</pallas_src>

<mosaic_0001>
module attributes {stable_mosaic.version = 11 : i64} {
  func.func @_wide_norm_kernel(%arg0: i32, %arg1: memref<18x1024xf32, #tpu.memory_space<vmem>>, %arg2: memref<1024x128xbf16, #tpu.memory_space<vmem>>, %arg3: memref<18x128xf32, #tpu.memory_space<vmem>>) attributes {dimension_semantics = [#tpu.dimension_semantics<parallel>], iteration_bounds = array<i64: 1>, scalar_prefetch = 0 : i64, scratch_operands = 0 : i64, tpu.core_type = #tpu.core_type<tc>, window_params = [{transform_indices = @transform_0, window_bounds = array<i64: 18, 1024>}, {pipeline_mode = #tpu.pipeline_mode<synchronous>, transform_indices = @transform_1, window_bounds = array<i64: 1024, 128>}, {transform_indices = @transform_2, window_bounds = array<i64: 18, 128>}]} {
    %c0 = arith.constant 0 : index
    %c0_0 = arith.constant 0 : index
    %0 = vector.load %arg2[%c0, %c0_0] : memref<1024x128xbf16, #tpu.memory_space<vmem>>, vector<1024x128xbf16>
    %c0_1 = arith.constant 0 : index
    %c0_2 = arith.constant 0 : index
    %1 = vector.load %arg1[%c0_1, %c0_2] : memref<18x1024xf32, #tpu.memory_space<vmem>>, vector<18x1024xf32>
    %2 = arith.mulf %1, %1 : vector<18x1024xf32>
    %3 = arith.truncf %2 : vector<18x1024xf32> to vector<18x1024xbf16>
    %4 = arith.extf %3 : vector<18x1024xbf16> to vector<18x1024xf32>
    %5 = arith.subf %2, %4 : vector<18x1024xf32>
    %6 = arith.truncf %5 : vector<18x1024xf32> to vector<18x1024xbf16>
    %cst = arith.constant dense<0.000000e+00> : vector<18x128xf32>
    %7 = tpu.matmul %3, %0, %cst {dimension_numbers = #tpu.dot_dimension_numbers<[1], [0], [0], [1], [0, 0, 1, 1], [], []>} : vector<18x1024xbf16>, vector<1024x128xbf16>, vector<18x128xf32> -> vector<18x128xf32>
    %cst_3 = arith.constant dense<0.000000e+00> : vector<18x128xf32>
    %8 = tpu.matmul %6, %0, %cst_3 {dimension_numbers = #tpu.dot_dimension_numbers<[1], [0], [0], [1], [0, 0, 1, 1], [], []>} : vector<18x1024xbf16>, vector<1024x128xbf16>, vector<18x128xf32> -> vector<18x128xf32>
    %9 = arith.addf %7, %8 : vector<18x128xf32>
    %10 = math.sqrt %9 : vector<18x128xf32>
    %c0_4 = arith.constant 0 : index
    %c0_5 = arith.constant 0 : index
    %11 = vector.load %arg3[%c0_4, %c0_5] : memref<18x128xf32, #tpu.memory_space<vmem>>, vector<18x128xf32>
    tpu.vector_store %arg3[%c0_4, %c0_5], %10 {strides = array<i32>} : memref<18x128xf32, #tpu.memory_space<vmem>>, vector<18x128xf32>,
    return
  }
  func.func @transform_0(%arg0: i32) -> (i32, i32) {
    %c0_i32 = arith.constant 0 : i32
    %c0_i32_0 = arith.constant 0 : i32
    return %arg0, %c0_i32 : i32, i32
  }
  func.func @transform_1(%arg0: i32) -> (i32, i32) {
    %c0_i32 = arith.constant 0 : i32
    %c0_i32_0 = arith.constant 0 : i32
    %c0_i32_1 = arith.constant 0 : i32
    return %c0_i32, %c0_i32_0 : i32, i32
  }
  func.func @transform_2(%arg0: i32) -> (i32, i32) {
    %c0_i32 = arith.constant 0 : i32
    %c0_i32_0 = arith.constant 0 : i32
    return %arg0, %c0_i32 : i32, i32
  }
}

</mosaic_0001>

<llo_original>
// kernel: tpu_custom_call.1
$region0: #{tpu_custom_call.1}
  #allocation0 [shape = 'u32[]', space=smem, size = 0x4, offset = 0x4, fixed_abs, tag = 'smem constant byte address 0x4 - core index']
  #allocation1 [shape = 'u32[144,128]{1,0:T(1,128)}', space=vmem, size = 0x12000, scoped, tag = 'internal scratch']
  %s0 = inlined_call_operand.hbm [shape: f32[18,1024], index: 0, kind: input, shape index: {}]
  %s1 = inlined_call_operand.hbm [shape: bf16[1024,128], index: 1, kind: input, shape index: {}]
  %s2 = inlined_call_operand.hbm [shape: f32[18,128], index: 2, kind: output, shape index: {}]
  %s3 = sld [smem:[#allocation0]]
  $region26: #{tpu_custom_call.1} parent=0
    _
  %s5 = ssub.s32 1, %s3
  %s6 = scalar_select 0, %s5, %s3
  $region1: #{tpu_custom_call.1} parent=0
    #allocation2 [shape = 'u8[98304]{0}', space=vmem, size = 0x18000, scoped, tag = 'input window, operand 0, single buffered']
    #allocation3 [shape = 's32[1]{0}', space=sflag, size = 0x4, scoped, tag = 'scoped memory for tpu_custom_call.1']
    #allocation4 [shape = 's32[1]{0}', space=sflag, size = 0x4, scoped, tag = 'scoped memory for tpu_custom_call.1']
    #allocation5 [shape = 'u8[262144]{0}', space=vmem, size = 0x40000, scoped, tag = 'input window, operand 1, single buffered']
    #allocation6 [shape = 's32[1]{0}', space=sflag, size = 0x4, scoped, tag = 'scoped memory for tpu_custom_call.1']
    #allocation7 [shape = 'u8[12288]{0}', space=vmem, size = 0x3000, scoped, tag = 'output window, operand 0, single buffered']
    %7 = vsyncpa [#allocation3], 0
    %8 = vsyncpa [#allocation6], 0
    %9 = vsyncpa [#allocation4], 0
    // Predicated region
    $region2: #{tpu_custom_call.1} parent=1 // pred_check
      _
    $region3: #{tpu_custom_call.1} parent=1 // pred_check_branch
      %11 = sbr.rel (0) target = $region5
    $region4: #{tpu_custom_call.1} parent=1 // pred_region
      %s13 = ssub.s32 3072, 3072
      %14 = vsyncadd [#allocation3], %s13
      %s15 = sshll.u32 [#allocation2], 4
      %s16 = int_to_ptr.vmem [resolvable:$true] %s15
      %21 = dma.hbm_to_vmem [thread:$0]  %s0, 3072, %s16, [#allocation3], 1024, 1024, 64
    $region5: #{tpu_custom_call.1} parent=1 // pred_fallthru
      _
    // Predicated region
    $region6: #{tpu_custom_call.1} parent=1 // pred_check
      _
    $region7: #{tpu_custom_call.1} parent=1 // pred_check_branch
      %23 = sbr.rel (0) target = $region9
    $region8: #{tpu_custom_call.1} parent=1 // pred_region
      %s25 = ssub.s32 8192, 8192
      %26 = vsyncadd [#allocation6], %s25
      %s27 = sshll.u32 [#allocation5], 4
      %s28 = int_to_ptr.vmem [resolvable:$true] %s27
      %33 = dma.hbm_to_vmem [thread:$0]  %s1, 8192, %s28, [#allocation6], 64, 64, 4
    $region9: #{tpu_custom_call.1} parent=1 // pred_fallthru
      _
    // Predicated region
    $region10: #{tpu_custom_call.1} parent=1 // pred_check
      _
    $region11: #{tpu_custom_call.1} parent=1 // pred_check_branch
      %35 = sbr.rel (0) target = $region13
    $region12: #{tpu_custom_call.1} parent=1 // pred_region
      %36 = dma.done [#allocation3], 3072
    $region13: #{tpu_custom_call.1} parent=1 // pred_fallthru
      _
    // Predicated region
    $region14: #{tpu_custom_call.1} parent=1 // pred_check
      _
    $region15: #{tpu_custom_call.1} parent=1 // pred_check_branch
      %38 = sbr.rel (0) target = $region17
    $region16: #{tpu_custom_call.1} parent=1 // pred_region
      %39 = dma.done [#allocation6], 8192
    $region17: #{tpu_custom_call.1} parent=1 // pred_fallthru
      _
    %v41 = vld [vmem:[#allocation5] sm:$0xf]
    %v42 = vld [vmem:[#allocation5 + $0x4] sm:$0xf]
    %v43 = vld [vmem:[#allocation5 + $0x8] sm:$0xf]
    %v44 = vld [vmem:[#allocation5 + $0xc] sm:$0xf]
    %v45 = vld [vmem:[#allocation5 + $0x10] sm:$0xf]
    %v46 = vld [vmem:[#allocation5 + $0x14] sm:$0xf]
    %v47 = vld [vmem:[#allocation5 + $0x18] sm:$0xf]
    %v48 = vld [vmem:[#allocation5 + $0x1c] sm:$0xf]
    %v49 = vld [vmem:[#allocation5 + $0x20] sm:$0xf]
    %v50 = vld [vmem:[#allocation5 + $0x24] sm:$0xf]
    %v51 = vld [vmem:[#allocation5 + $0x28] sm:$0xf]
    %v52 = vld [vmem:[#allocation5 + $0x2c] sm:$0xf]
    %v53 = vld [vmem:[#allocation5 + $0x30] sm:$0xf]
    %v54 = vld [vmem:[#allocation5 + $0x34] sm:$0xf]
    %v55 = vld [vmem:[#allocation5 + $0x38] sm:$0xf]
    %v56 = vld [vmem:[#allocation5 + $0x3c] sm:$0xf]
    %v57 = vld [vmem:[#allocation5 + $0x40] sm:$0xf]
    %v58 = vld [vmem:[#allocation5 + $0x44] sm:$0xf]
    %v59 = vld [vmem:[#allocation5 + $0x48] sm:$0xf]
    %v60 = vld [vmem:[#allocation5 + $0x4c] sm:$0xf]
    %v61 = vld [vmem:[#allocation5 + $0x50] sm:$0xf]
    %v62 = vld [vmem:[#allocation5 + $0x54] sm:$0xf]
    %v63 = vld [vmem:[#allocation5 + $0x58] sm:$0xf]
    %v64 = vld [vmem:[#allocation5 + $0x5c] sm:$0xf]
    %v65 = vld [vmem:[#allocation5 + $0x60] sm:$0xf]
    %v66 = vld [vmem:[#allocation5 + $0x64] sm:$0xf]
    %v67 = vld [vmem:[#allocation5 + $0x68] sm:$0xf]
    %v68 = vld [vmem:[#allocation5 + $0x6c] sm:$0xf]
    %v69 = vld [vmem:[#allocation5 + $0x70] sm:$0xf]
    %v70 = vld [vmem:[#allocation5 + $0x74] sm:$0xf]
    %v71 = vld [vmem:[#allocation5 + $0x78] sm:$0xf]
    %v72 = vld [vmem:[#allocation5 + $0x7c] sm:$0xf]
    %v73 = vld [vmem:[#allocation5 + $0x80] sm:$0xf]
    %v74 = vld [vmem:[#allocation5 + $0x84] sm:$0xf]
    %v75 = vld [vmem:[#allocation5 + $0x88] sm:$0xf]
    %v76 = vld [vmem:[#allocation5 + $0x8c] sm:$0xf]
    %v77 = vld [vmem:[#allocation5 + $0x90] sm:$0xf]
    %v78 = vld [vmem:[#allocation5 + $0x94] sm:$0xf]
    %v79 = vld [vmem:[#allocation5 + $0x98] sm:$0xf]
    %v80 = vld [vmem:[#allocation5 + $0x9c] sm:$0xf]
    %v81 = vld [vmem:[#allocation5 + $0xa0] sm:$0xf]
    %v82 = vld [vmem:[#allocation5 + $0xa4] sm:$0xf]
    %v83 = vld [vmem:[#allocation5 + $0xa8] sm:$0xf]
    %v84 = vld [vmem:[#allocation5 + $0xac] sm:$0xf]
    %v85 = vld [vmem:[#allocation5 + $0xb0] sm:$0xf]
    %v86 = vld [vmem:[#allocation5 + $0xb4] sm:$0xf]
    %v87 = vld [vmem:[#allocation5 + $0xb8] sm:$0xf]
    %v88 = vld [vmem:[#allocation5 + $0xbc] sm:$0xf]
    %v89 = vld [vmem:[#allocation5 + $0xc0] sm:$0xf]
    %v90 = vld [vmem:[#allocation5 + $0xc4] sm:$0xf]
    %v91 = vld [vmem:[#allocation5 + $0xc8] sm:$0xf]
    %v92 = vld [vmem:[#allocation5 + $0xcc] sm:$0xf]
    %v93 = vld [vmem:[#allocation5 + $0xd0] sm:$0xf]
    %v94 = vld [vmem:[#allocation5 + $0xd4] sm:$0xf]
    %v95 = vld [vmem:[#allocation5 + $0xd8] sm:$0xf]
    %v96 = vld [vmem:[#allocation5 + $0xdc] sm:$0xf]
    %v97 = vld [vmem:[#allocation5 + $0xe0] sm:$0xf]
    %v98 = vld [vmem:[#allocation5 + $0xe4] sm:$0xf]
    %v99 = vld [vmem:[#allocation5 + $0xe8] sm:$0xf]
    %v100 = vld [vmem:[#allocation5 + $0xec] sm:$0xf]
    %v101 = vld [vmem:[#allocation5 + $0xf0] sm:$0xf]
    %v102 = vld [vmem:[#allocation5 + $0xf4] sm:$0xf]
    %v103 = vld [vmem:[#allocation5 + $0xf8] sm:$0xf]
    %v104 = vld [vmem:[#allocation5 + $0xfc] sm:$0xf]
    %v105 = vld [vmem:[#allocation5 + $0x100] sm:$0xf]
    %v106 = vld [vmem:[#allocation5 + $0x104] sm:$0xf]
    %v107 = vld [vmem:[#allocation5 + $0x108] sm:$0xf]
    %v108 = vld [vmem:[#allocation5 + $0x10c] sm:$0xf]
    %v109 = vld [vmem:[#allocation5 + $0x110] sm:$0xf]
    %v110 = vld [vmem:[#allocation5 + $0x114] sm:$0xf]
    %v111 = vld [vmem:[#allocation5 + $0x118] sm:$0xf]
    %v112 = vld [vmem:[#allocation5 + $0x11c] sm:$0xf]
    %v113 = vld [vmem:[#allocation5 + $0x120] sm:$0xf]
    %v114 = vld [vmem:[#allocation5 + $0x124] sm:$0xf]
    %v115 = vld [vmem:[#allocation5 + $0x128] sm:$0xf]
    %v116 = vld [vmem:[#allocation5 + $0x12c] sm:$0xf]
    %v117 = vld [vmem:[#allocation5 + $0x130] sm:$0xf]
    %v118 = vld [vmem:[#allocation5 + $0x134] sm:$0xf]
    %v119 = vld [vmem:[#allocation5 + $0x138] sm:$0xf]
    %v120 = vld [vmem:[#allocation5 + $0x13c] sm:$0xf]
    %v121 = vld [vmem:[#allocation5 + $0x140] sm:$0xf]
    %v122 = vld [vmem:[#allocation5 + $0x144] sm:$0xf]
    %v123 = vld [vmem:[#allocation5 + $0x148] sm:$0xf]
    %v124 = vld [vmem:[#allocation5 + $0x14c] sm:$0xf]
    %v125 = vld [vmem:[#allocation5 + $0x150] sm:$0xf]
    %v126 = vld [vmem:[#allocation5 + $0x154] sm:$0xf]
    %v127 = vld [vmem:[#allocation5 + $0x158] sm:$0xf]
    %v128 = vld [vmem:[#allocation5 + $0x15c] sm:$0xf]
    %v129 = vld [vmem:[#allocation5 + $0x160] sm:$0xf]
    %v130 = vld [vmem:[#allocation5 + $0x164] sm:$0xf]
    %v131 = vld [vmem:[#allocation5 + $0x168] sm:$0xf]
    %v132 = vld [vmem:[#allocation5 + $0x16c] sm:$0xf]
    %v133 = vld [vmem:[#allocation5 + $0x170] sm:$0xf]
    %v134 = vld [vmem:[#allocation5 + $0x174] sm:$0xf]
    %v135 = vld [vmem:[#allocation5 + $0x178] sm:$0xf]
    %v136 = vld [vmem:[#allocation5 + $0x17c] sm:$0xf]
    %v137 = vld [vmem:[#allocation5 + $0x180] sm:$0xf]
    %v138 = vld [vmem:[#allocation5 + $0x184] sm:$0xf]
    %v139 = vld [vmem:[#allocation5 + $0x188] sm:$0xf]
    %v140 = vld [vmem:[#allocation5 + $0x18c] sm:$0xf]
    %v141 = vld [vmem:[#allocation5 + $0x190] sm:$0xf]
    %v142 = vld [vmem:[#allocation5 + $0x194] sm:$0xf]
    %v143 = vld [vmem:[#allocation5 + $0x198] sm:$0xf]
    %v144 = vld [vmem:[#allocation5 + $0x19c] sm:$0xf]
    %v145 = vld [vmem:[#allocation5 + $0x1a0] sm:$0xf]
    %v146 = vld [vmem:[#allocation5 + $0x1a4] sm:$0xf]
    %v147 = vld [vmem:[#allocation5 + $0x1a8] sm:$0xf]
    %v148 = vld [vmem:[#allocation5 + $0x1ac] sm:$0xf]
    %v149 = vld [vmem:[#allocation5 + $0x1b0] sm:$0xf]
    %v150 = vld [vmem:[#allocation5 + $0x1b4] sm:$0xf]
    %v151 = vld [vmem:[#allocation5 + $0x1b8] sm:$0xf]
    %v152 = vld [vmem:[#allocation5 + $0x1bc] sm:$0xf]
    %v153 = vld [vmem:[#allocation5 + $0x1c0] sm:$0xf]
    %v154 = vld [vmem:[#allocation5 + $0x1c4] sm:$0xf]
    %v155 = vld [vmem:[#allocation5 + $0x1c8] sm:$0xf]
    %v156 = vld [vmem:[#allocation5 + $0x1cc] sm:$0xf]
    %v157 = vld [vmem:[#allocation5 + $0x1d0] sm:$0xf]
    %v158 = vld [vmem:[#allocation5 + $0x1d4] sm:$0xf]
    %v159 = vld [vmem:[#allocation5 + $0x1d8] sm:$0xf]
    %v160 = vld [vmem:[#allocation5 + $0x1dc] sm:$0xf]
    %v161 = vld [vmem:[#allocation5 + $0x1e0] sm:$0xf]
    %v162 = vld [vmem:[#allocation5 + $0x1e4] sm:$0xf]
    %v163 = vld [vmem:[#allocation5 + $0x1e8] sm:$0xf]
    %v164 = vld [vmem:[#allocation5 + $0x1ec] sm:$0xf]
    %v165 = vld [vmem:[#allocation5 + $0x1f0] sm:$0xf]
    %v166 = vld [vmem:[#allocation5 + $0x1f4] sm:$0xf]
    %v167 = vld [vmem:[#allocation5 + $0x1f8] sm:$0xf]
    %v168 = vld [vmem:[#allocation5 + $0x1fc] sm:$0xf]
    %v169 = vld [vmem:[#allocation2] sm:$0xff]
    %v170 = vld [vmem:[#allocation2 + $0x8] sm:$0xff]
    %v171 = vld [vmem:[#allocation2 + $0x10] sm:$0xff]
    %v172 = vld [vmem:[#allocation2 + $0x18] sm:$0xff]
    %v173 = vld [vmem:[#allocation2 + $0x20] sm:$0xff]
    %v174 = vld [vmem:[#allocation2 + $0x28] sm:$0xff]
    %v175 = vld [vmem:[#allocation2 + $0x30] sm:$0xff]
    %v176 = vld [vmem:[#allocation2 + $0x38] sm:$0xff]
    %v177 = vld [vmem:[#allocation2 + $0x40] sm:$0xff]
    %v178 = vld [vmem:[#allocation2 + $0x48] sm:$0xff]
    %v179 = vld [vmem:[#allocation2 + $0x50] sm:$0xff]
    %v180 = vld [vmem:[#allocation2 + $0x58] sm:$0xff]
    %v181 = vld [vmem:[#allocation2 + $0x60] sm:$0xff]
    %v182 = vld [vmem:[#allocation2 + $0x68] sm:$0xff]
    %v183 = vld [vmem:[#allocation2 + $0x70] sm:$0xff]
    %v184 = vld [vmem:[#allocation2 + $0x78] sm:$0xff]
    %v185 = vld [vmem:[#allocation2 + $0x80] sm:$0x3]
    %v186 = vld [vmem:[#allocation2 + $0x88] sm:$0x3]
    %v187 = vld [vmem:[#allocation2 + $0x90] sm:$0x3]
    %v188 = vld [vmem:[#allocation2 + $0x98] sm:$0x3]
    %v189 = vld [vmem:[#allocation2 + $0xa0] sm:$0x3]
    %v190 = vld [vmem:[#allocation2 + $0xa8] sm:$0x3]
    %v191 = vld [vmem:[#allocation2 + $0xb0] sm:$0x3]
    %v192 = vld [vmem:[#allocation2 + $0xb8] sm:$0x3]
    %v193 = vmul.f32 %v169, %v169
    %v194 = vmul.f32 %v170, %v170
    %v195 = vmul.f32 %v171, %v171
    %v196 = vmul.f32 %v172, %v172
    %v197 = vmul.f32 %v173, %v173
    %v198 = vmul.f32 %v174, %v174
    %v199 = vmul.f32 %v175, %v175
    %v200 = vmul.f32 %v176, %v176
    %v201 = vmul.f32 %v177, %v177
    %v202 = vmul.f32 %v178, %v178
    %v203 = vmul.f32 %v179, %v179
    %v204 = vmul.f32 %v180, %v180
    %v205 = vmul.f32 %v181, %v181
    %v206 = vmul.f32 %v182, %v182
    %v207 = vmul.f32 %v183, %v183
    %v208 = vmul.f32 %v184, %v184
    %v209 = vmul.f32 %v185, %v185
    %v210 = vmul.f32 %v186, %v186
    %v211 = vmul.f32 %v187, %v187
    %v212 = vmul.f32 %v188, %v188
    %v213 = vmul.f32 %v189, %v189
    %v214 = vmul.f32 %v190, %v190
    %v215 = vmul.f32 %v191, %v191
    %v216 = vmul.f32 %v192, %v192
    %v217 = vpack.c.bf16 %v201, %v193
    %v218 = vpack.c.bf16 %v202, %v194
    %v219 = vpack.c.bf16 %v203, %v195
    %v220 = vpack.c.bf16 %v204, %v196
    %v221 = vpack.c.bf16 %v205, %v197
    %v222 = vpack.c.bf16 %v206, %v198
    %v223 = vpack.c.bf16 %v207, %v199
    %v224 = vpack.c.bf16 %v208, %v200
    %v225 = vpack.c.bf16 %v209, %v209
    %v226 = vpack.c.bf16 %v210, %v210
    %v227 = vpack.c.bf16 %v211, %v211
    %v228 = vpack.c.bf16 %v212, %v212
    %v229 = vpack.c.bf16 %v213, %v213
    %v230 = vpack.c.bf16 %v214, %v214
    %v231 = vpack.c.bf16 %v215, %v215
    %v232 = vpack.c.bf16 %v216, %v216
    %v233 = vunpack.c.l.bf16 %v217
    %v234 = vunpack.c.l.bf16 %v218
    %v235 = vunpack.c.l.bf16 %v219
    %v236 = vunpack.c.l.bf16 %v220
    %v237 = vunpack.c.l.bf16 %v221
    %v238 = vunpack.c.l.bf16 %v222
    %v239 = vunpack.c.l.bf16 %v223
    %v240 = vunpack.c.l.bf16 %v224
    %v241 = vunpack.c.h.bf16 %v217
    %v242 = vunpack.c.h.bf16 %v218
    %v243 = vunpack.c.h.bf16 %v219
    %v244 = vunpack.c.h.bf16 %v220
    %v245 = vunpack.c.h.bf16 %v221
    %v246 = vunpack.c.h.bf16 %v222
    %v247 = vunpack.c.h.bf16 %v223
    %v248 = vunpack.c.h.bf16 %v224
    %v249 = vunpack.c.l.bf16 %v225
    %v250 = vunpack.c.l.bf16 %v226
    %v251 = vunpack.c.l.bf16 %v227
    %v252 = vunpack.c.l.bf16 %v228
    %v253 = vunpack.c.l.bf16 %v229
    %v254 = vunpack.c.l.bf16 %v230
    %v255 = vunpack.c.l.bf16 %v231
    %v256 = vunpack.c.l.bf16 %v232
    %v257 = vsub.f32 %v193, %v233
    %v258 = vsub.f32 %v194, %v234
    %v259 = vsub.f32 %v195, %v235
    %v260 = vsub.f32 %v196, %v236
    %v261 = vsub.f32 %v197, %v237
    %v262 = vsub.f32 %v198, %v238
    %v263 = vsub.f32 %v199, %v239
    %v264 = vsub.f32 %v200, %v240
    %v265 = vsub.f32 %v201, %v241
    %v266 = vsub.f32 %v202, %v242
    %v267 = vsub.f32 %v203, %v243
    %v268 = vsub.f32 %v204, %v244
    %v269 = vsub.f32 %v205, %v245
    %v270 = vsub.f32 %v206, %v246
    %v271 = vsub.f32 %v207, %v247
    %v272 = vsub.f32 %v208, %v248
    %v273 = vsub.f32 %v209, %v249
    %v274 = vsub.f32 %v210, %v250
    %v275 = vsub.f32 %v211, %v251
    %v276 = vsub.f32 %v212, %v252
    %v277 = vsub.f32 %v213, %v253
    %v278 = vsub.f32 %v214, %v254
    %v279 = vsub.f32 %v215, %v255
    %v280 = vsub.f32 %v216, %v256
    %v281 = vpack.c.bf16 %v265, %v257
    %v282 = vpack.c.bf16 %v266, %v258
    %v283 = vpack.c.bf16 %v267, %v259
    %v284 = vpack.c.bf16 %v268, %v260
    %v285 = vpack.c.bf16 %v269, %v261
    %v286 = vpack.c.bf16 %v270, %v262
    %v287 = vpack.c.bf16 %v271, %v263
    %v288 = vpack.c.bf16 %v272, %v264
    %v289 = vpack.c.bf16 %v273, %v273
    %v290 = vpack.c.bf16 %v274, %v274
    %v291 = vpack.c.bf16 %v275, %v275
    %v292 = vpack.c.bf16 %v276, %v276
    %v293 = vpack.c.bf16 %v277, %v277
    %v294 = vpack.c.bf16 %v278, %v278
    %v295 = vpack.c.bf16 %v279, %v279
    %v296 = vpack.c.bf16 %v280, %v280
    %v425 = vunpack.c.l.b16 %v41
    %v426 = vunpack.c.l.b16 %v42
    %v427 = vunpack.c.l.b16 %v43
    %v428 = vunpack.c.l.b16 %v44
    %v429 = vunpack.c.l.b16 %v45
    %v430 = vunpack.c.l.b16 %v46
    %v431 = vunpack.c.l.b16 %v47
    %v432 = vunpack.c.l.b16 %v48
    %v433 = vunpack.c.l.b16 %v49
    %v434 = vunpack.c.l.b16 %v50
    %v435 = vunpack.c.l.b16 %v51
    %v436 = vunpack.c.l.b16 %v52
    %v437 = vunpack.c.l.b16 %v53
    %v438 = vunpack.c.l.b16 %v54
    %v439 = vunpack.c.l.b16 %v55
    %v440 = vunpack.c.l.b16 %v56
    %v441 = vunpack.c.l.b16 %v57
    %v442 = vunpack.c.l.b16 %v58
    %v443 = vunpack.c.l.b16 %v59
    %v444 = vunpack.c.l.b16 %v60
    %v445 = vunpack.c.l.b16 %v61
    %v446 = vunpack.c.l.b16 %v62
    %v447 = vunpack.c.l.b16 %v63
    %v448 = vunpack.c.l.b16 %v64
    %v449 = vunpack.c.l.b16 %v65
    %v450 = vunpack.c.l.b16 %v66
    %v451 = vunpack.c.l.b16 %v67
    %v452 = vunpack.c.l.b16 %v68
    %v453 = vunpack.c.l.b16 %v69
    %v454 = vunpack.c.l.b16 %v70
    %v455 = vunpack.c.l.b16 %v71
    %v456 = vunpack.c.l.b16 %v72
    %v457 = vunpack.c.l.b16 %v73
    %v458 = vunpack.c.l.b16 %v74
    %v459 = vunpack.c.l.b16 %v75
    %v460 = vunpack.c.l.b16 %v76
    %v461 = vunpack.c.l.b16 %v77
    %v462 = vunpack.c.l.b16 %v78
    %v463 = vunpack.c.l.b16 %v79
    %v464 = vunpack.c.l.b16 %v80
    %v465 = vunpack.c.l.b16 %v81
    %v466 = vunpack.c.l.b16 %v82
    %v467 = vunpack.c.l.b16 %v83
    %v468 = vunpack.c.l.b16 %v84
    %v469 = vunpack.c.l.b16 %v85
    %v470 = vunpack.c.l.b16 %v86
    %v471 = vunpack.c.l.b16 %v87
    %v472 = vunpack.c.l.b16 %v88
    %v473 = vunpack.c.l.b16 %v89
    %v474 = vunpack.c.l.b16 %v90
    %v475 = vunpack.c.l.b16 %v91
    %v476 = vunpack.c.l.b16 %v92
    %v477 = vunpack.c.l.b16 %v93
    %v478 = vunpack.c.l.b16 %v94
    %v479 = vunpack.c.l.b16 %v95
    %v480 = vunpack.c.l.b16 %v96
    %v481 = vunpack.c.l.b16 %v97
    %v482 = vunpack.c.l.b16 %v98
    %v483 = vunpack.c.l.b16 %v99
    %v484 = vunpack.c.l.b16 %v100
    %v485 = vunpack.c.l.b16 %v101
    %v486 = vunpack.c.l.b16 %v102
    %v487 = vunpack.c.l.b16 %v103
    %v488 = vunpack.c.l.b16 %v104
    %v489 = vunpack.c.l.b16 %v105
    %v490 = vunpack.c.l.b16 %v106
    %v491 = vunpack.c.l.b16 %v107
    %v492 = vunpack.c.l.b16 %v108
    %v493 = vunpack.c.l.b16 %v109
    %v494 = vunpack.c.l.b16 %v110
    %v495 = vunpack.c.l.b16 %v111
    %v496 = vunpack.c.l.b16 %v112
    %v497 = vunpack.c.l.b16 %v113
    %v498 = vunpack.c.l.b16 %v114
    %v499 = vunpack.c.l.b16 %v115
    %v500 = vunpack.c.l.b16 %v116
    %v501 = vunpack.c.l.b16 %v117
    %v502 = vunpack.c.l.b16 %v118
    %v503 = vunpack.c.l.b16 %v119
    %v504 = vunpack.c.l.b16 %v120
    %v505 = vunpack.c.l.b16 %v121
    %v506 = vunpack.c.l.b16 %v122
    %v507 = vunpack.c.l.b16 %v123
    %v508 = vunpack.c.l.b16 %v124
    %v509 = vunpack.c.l.b16 %v125
    %v510 = vunpack.c.l.b16 %v126
    %v511 = vunpack.c.l.b16 %v127
    %v512 = vunpack.c.l.b16 %v128
    %v513 = vunpack.c.l.b16 %v129
    %v514 = vunpack.c.l.b16 %v130
    %v515 = vunpack.c.l.b16 %v131
    %v516 = vunpack.c.l.b16 %v132
    %v517 = vunpack.c.l.b16 %v133
    %v518 = vunpack.c.l.b16 %v134
    %v519 = vunpack.c.l.b16 %v135
    %v520 = vunpack.c.l.b16 %v136
    %v521 = vunpack.c.l.b16 %v137
    %v522 = vunpack.c.l.b16 %v138
    %v523 = vunpack.c.l.b16 %v139
    %v524 = vunpack.c.l.b16 %v140
    %v525 = vunpack.c.l.b16 %v141
    %v526 = vunpack.c.l.b16 %v142
    %v527 = vunpack.c.l.b16 %v143
    %v528 = vunpack.c.l.b16 %v144
    %v529 = vunpack.c.l.b16 %v145
    %v530 = vunpack.c.l.b16 %v146
    %v531 = vunpack.c.l.b16 %v147
    %v532 = vunpack.c.l.b16 %v148
    %v533 = vunpack.c.l.b16 %v149
    %v534 = vunpack.c.l.b16 %v150
    %v535 = vunpack.c.l.b16 %v151
    %v536 = vunpack.c.l.b16 %v152
    %v537 = vunpack.c.l.b16 %v153
    %v538 = vunpack.c.l.b16 %v154
    %v539 = vunpack.c.l.b16 %v155
    %v540 = vunpack.c.l.b16 %v156
    %v541 = vunpack.c.l.b16 %v157
    %v542 = vunpack.c.l.b16 %v158
    %v543 = vunpack.c.l.b16 %v159
    %v544 = vunpack.c.l.b16 %v160
    %v545 = vunpack.c.l.b16 %v161
    %v546 = vunpack.c.l.b16 %v162
    %v547 = vunpack.c.l.b16 %v163
    %v548 = vunpack.c.l.b16 %v164
    %v549 = vunpack.c.l.b16 %v165
    %v550 = vunpack.c.l.b16 %v166
    %v551 = vunpack.c.l.b16 %v167
    %v552 = vunpack.c.l.b16 %v168
    %v553 = vpack.c.b16 %v426, %v425
    %v554 = vpack.c.b16 %v428, %v427
    %v555 = vpack.c.b16 %v430, %v429
    %v556 = vpack.c.b16 %v432, %v431
    %v557 = vpack.c.b16 %v434, %v433
    %v558 = vpack.c.b16 %v436, %v435
    %v559 = vpack.c.b16 %v438, %v437
    %v560 = vpack.c.b16 %v440, %v439
    %v561 = vpack.c.b16 %v442, %v441
    %v562 = vpack.c.b16 %v444, %v443
    %v563 = vpack.c.b16 %v446, %v445
    %v564 = vpack.c.b16 %v448, %v447
    %v565 = vpack.c.b16 %v450, %v449
    %v566 = vpack.c.b16 %v452, %v451
    %v567 = vpack.c.b16 %v454, %v453
    %v568 = vpack.c.b16 %v456, %v455
    %v569 = vpack.c.b16 %v458, %v457
    %v570 = vpack.c.b16 %v460, %v459
    %v571 = vpack.c.b16 %v462, %v461
    %v572 = vpack.c.b16 %v464, %v463
    %v573 = vpack.c.b16 %v466, %v465
    %v574 = vpack.c.b16 %v468, %v467
    %v575 = vpack.c.b16 %v470, %v469
    %v576 = vpack.c.b16 %v472, %v471
    %v577 = vpack.c.b16 %v474, %v473
    %v578 = vpack.c.b16 %v476, %v475
    %v579 = vpack.c.b16 %v478, %v477
    %v580 = vpack.c.b16 %v480, %v479
    %v581 = vpack.c.b16 %v482, %v481
    %v582 = vpack.c.b16 %v484, %v483
    %v583 = vpack.c.b16 %v486, %v485
    %v584 = vpack.c.b16 %v488, %v487
    %v585 = vpack.c.b16 %v490, %v489
    %v586 = vpack.c.b16 %v492, %v491
    %v587 = vpack.c.b16 %v494, %v493
    %v588 = vpack.c.b16 %v496, %v495
    %v589 = vpack.c.b16 %v498, %v497
    %v590 = vpack.c.b16 %v500, %v499
    %v591 = vpack.c.b16 %v502, %v501
    %v592 = vpack.c.b16 %v504, %v503
    %v593 = vpack.c.b16 %v506, %v505
    %v594 = vpack.c.b16 %v508, %v507
    %v595 = vpack.c.b16 %v510, %v509
    %v596 = vpack.c.b16 %v512, %v511
    %v597 = vpack.c.b16 %v514, %v513
    %v598 = vpack.c.b16 %v516, %v515
    %v599 = vpack.c.b16 %v518, %v517
    %v600 = vpack.c.b16 %v520, %v519
    %v601 = vpack.c.b16 %v522, %v521
    %v602 = vpack.c.b16 %v524, %v523
    %v603 = vpack.c.b16 %v526, %v525
    %v604 = vpack.c.b16 %v528, %v527
    %v605 = vpack.c.b16 %v530, %v529
    %v606 = vpack.c.b16 %v532, %v531
    %v607 = vpack.c.b16 %v534, %v533
    %v608 = vpack.c.b16 %v536, %v535
    %v609 = vpack.c.b16 %v538, %v537
    %v610 = vpack.c.b16 %v540, %v539
    %v611 = vpack.c.b16 %v542, %v541
    %v612 = vpack.c.b16 %v544, %v543
    %v613 = vpack.c.b16 %v546, %v545
    %v614 = vpack.c.b16 %v548, %v547
    %v615 = vpack.c.b16 %v550, %v549
    %v616 = vpack.c.b16 %v552, %v551
    %681 = vmatprep.subr.bf16.mxu0 0
    %682 = vmatpush1.bf16.msra.mxu0 %v553
    %683 = vmatprep.subr.bf16.mxu0 0
    %684 = vmatpush1.bf16.msra.mxu0 %v554
    %685 = vmatprep.subr.bf16.mxu0 0
    %686 = vmatpush1.bf16.msra.mxu0 %v555
    %687 = vmatprep.subr.bf16.mxu0 0
    %688 = vmatpush1.bf16.msra.mxu0 %v556
    %689 = vmatprep.subr.bf16.mxu0 0
    %690 = vmatpush1.bf16.msra.mxu0 %v557
    %691 = vmatprep.subr.bf16.mxu0 0
    %692 = vmatpush1.bf16.msra.mxu0 %v558
    %693 = vmatprep.subr.bf16.mxu0 0
    %694 = vmatpush1.bf16.msra.mxu0 %v559
    %695 = vmatprep.subr.bf16.mxu0 0
    %696 = vmatpush1.bf16.msra.mxu0 %v560
    %697 = vmatprep.subr.bf16.mxu0 0
    %698 = vmatpush1.bf16.msra.mxu0 %v561
    %699 = vmatprep.subr.bf16.mxu0 0
    %700 = vmatpush1.bf16.msra.mxu0 %v562
    %701 = vmatprep.subr.bf16.mxu0 0
    %702 = vmatpush1.bf16.msra.mxu0 %v563
    %703 = vmatprep.subr.bf16.mxu0 0
    %704 = vmatpush1.bf16.msra.mxu0 %v564
    %705 = vmatprep.subr.bf16.mxu0 0
    %706 = vmatpush1.bf16.msra.mxu0 %v565
    %707 = vmatprep.subr.bf16.mxu0 0
    %708 = vmatpush1.bf16.msra.mxu0 %v566
    %709 = vmatprep.subr.bf16.mxu0 0
    %710 = vmatpush1.bf16.msra.mxu0 %v567
    %711 = vmatprep.subr.bf16.mxu0 0
    %712 = vmatpush1.bf16.msra.mxu0 %v568
    %713 = vmatprep.mubr.bf16.mxu0 %v282
    %714 = vmatmul.mubr.bf16.gmra.mrb[0].mxu0 %v281
    %v715 = vpop.f32.mrb[0].mxu0
    %v716 = vadd.f32 0.0, %v715
    %v717 = vpop.f32.mrb[0].mxu0
    %v718 = vpop.f32.mrb[0].mxu0
    %v719 = vadd.f32 0.0, %v718
    %v720 = vpop.f32.mrb[0].mxu0
    %721 = vmatprep.mubr.bf16.mxu0 %v290
    %722 = vmatmul.mubr.bf16.gmra.mrb[0].mxu0 %v289
    %v723 = vpop.f32.mrb[0].mxu0
    %v724 = vadd.f32 0.0, %v723
    %v725 = vpop.f32.mrb[0].mxu0
    %v726 = vpop.f32.mrb[0].mxu0
    %v727 = vpop.f32.mrb[0].mxu0
    %728 = vdwg.mxu0
    %729 = vmatprep.subr.bf16.mxu0 0
    %730 = vmatpush1.bf16.msra.mxu0 %v569
    %731 = vmatprep.subr.bf16.mxu0 0
    %732 = vmatpush1.bf16.msra.mxu0 %v570
    %733 = vmatprep.subr.bf16.mxu0 0
    %734 = vmatpush1.bf16.msra.mxu0 %v571
    %735 = vmatprep.subr.bf16.mxu0 0
    %736 = vmatpush1.bf16.msra.mxu0 %v572
    %737 = vmatprep.subr.bf16.mxu0 0
    %738 = vmatpush1.bf16.msra.mxu0 %v573
    %739 = vmatprep.subr.bf16.mxu0 0
    %740 = vmatpush1.bf16.msra.mxu0 %v574
    %741 = vmatprep.subr.bf16.mxu0 0
    %742 = vmatpush1.bf16.msra.mxu0 %v575
    %743 = vmatprep.subr.bf16.mxu0 0
    %744 = vmatpush1.bf16.msra.mxu0 %v576
    %745 = vmatprep.subr.bf16.mxu0 0
    %746 = vmatpush1.bf16.msra.mxu0 %v577
    %747 = vmatprep.subr.bf16.mxu0 0
    %748 = vmatpush1.bf16.msra.mxu0 %v578
    %749 = vmatprep.subr.bf16.mxu0 0
    %750 = vmatpush1.bf16.msra.mxu0 %v579
    %751 = vmatprep.subr.bf16.mxu0 0
    %752 = vmatpush1.bf16.msra.mxu0 %v580
    %753 = vmatprep.subr.bf16.mxu0 0
    %754 = vmatpush1.bf16.msra.mxu0 %v581
    %755 = vmatprep.subr.bf16.mxu0 0
    %756 = vmatpush1.bf16.msra.mxu0 %v582
    %757 = vmatprep.subr.bf16.mxu0 0
    %758 = vmatpush1.bf16.msra.mxu0 %v583
    %759 = vmatprep.subr.bf16.mxu0 0
    %760 = vmatpush1.bf16.msra.mxu0 %v584
    %761 = vmatprep.mubr.bf16.mxu0 %v284
    %762 = vmatmul.mubr.bf16.gmra.mrb[0].mxu0 %v283
    %v763 = vpop.f32.mrb[0].mxu0
    %v764 = vadd.f32 %v716, %v763
    %v765 = vpop.f32.mrb[0].mxu0
    %v766 = vpop.f32.mrb[0].mxu0
    %v767 = vadd.f32 %v719, %v766
    %v768 = vpop.f32.mrb[0].mxu0
    %769 = vmatprep.mubr.bf16.mxu0 %v292
    %770 = vmatmul.mubr.bf16.gmra.mrb[0].mxu0 %v291
    %v771 = vpop.f32.mrb[0].mxu0
    %v772 = vadd.f32 %v724, %v771
    %v773 = vpop.f32.mrb[0].mxu0
    %v774 = vpop.f32.mrb[0].mxu0
    %v775 = vpop.f32.mrb[0].mxu0
    %776 = vdwg.mxu0
    %777 = vmatprep.subr.bf16.mxu0 0
    %778 = vmatpush1.bf16.msra.mxu0 %v585
    %779 = vmatprep.subr.bf16.mxu0 0
    %780 = vmatpush1.bf16.msra.mxu0 %v586
    %781 = vmatprep.subr.bf16.mxu0 0
    %782 = vmatpush1.bf16.msra.mxu0 %v587
    %783 = vmatprep.subr.bf16.mxu0 0
    %784 = vmatpush1.bf16.msra.mxu0 %v588
    %785 = vmatprep.subr.bf16.mxu0 0
    %786 = vmatpush1.bf16.msra.mxu0 %v589
    %787 = vmatprep.subr.bf16.mxu0 0
    %788 = vmatpush1.bf16.msra.mxu0 %v590
    %789 = vmatprep.subr.bf16.mxu0 0
    %790 = vmatpush1.bf16.msra.mxu0 %v591
    %791 = vmatprep.subr.bf16.mxu0 0
    %792 = vmatpush1.bf16.msra.mxu0 %v592
    %793 = vmatprep.subr.bf16.mxu0 0
    %794 = vmatpush1.bf16.msra.mxu0 %v593
    %795 = vmatprep.subr.bf16.mxu0 0
    %796 = vmatpush1.bf16.msra.mxu0 %v594
    %797 = vmatprep.subr.bf16.mxu0 0
    %798 = vmatpush1.bf16.msra.mxu0 %v595
    %799 = vmatprep.subr.bf16.mxu0 0
    %800 = vmatpush1.bf16.msra.mxu0 %v596
    %801 = vmatprep.subr.bf16.mxu0 0
    %802 = vmatpush1.bf16.msra.mxu0 %v597
    %803 = vmatprep.subr.bf16.mxu0 0
    %804 = vmatpush1.bf16.msra.mxu0 %v598
    %805 = vmatprep.subr.bf16.mxu0 0
    %806 = vmatpush1.bf16.msra.mxu0 %v599
    %807 = vmatprep.subr.bf16.mxu0 0
    %808 = vmatpush1.bf16.msra.mxu0 %v600
    %809 = vmatprep.mubr.bf16.mxu0 %v286
    %810 = vmatmul.mubr.bf16.gmra.mrb[0].mxu0 %v285
    %v811 = vpop.f32.mrb[0].mxu0
    %v812 = vadd.f32 %v764, %v811
    %v813 = vpop.f32.mrb[0].mxu0
    %v814 = vpop.f32.mrb[0].mxu0
    %v815 = vadd.f32 %v767, %v814
    %v816 = vpop.f32.mrb[0].mxu0
    %817 = vmatprep.mubr.bf16.mxu0 %v294
    %818 = vmatmul.mubr.bf16.gmra.mrb[0].mxu0 %v293
    %v819 = vpop.f32.mrb[0].mxu0
    %v820 = vadd.f32 %v772, %v819
    %v821 = vpop.f32.mrb[0].mxu0
    %v822 = vpop.f32.mrb[0].mxu0
    %v823 = vpop.f32.mrb[0].mxu0
    %824 = vdwg.mxu0
    %825 = vmatprep.subr.bf16.mxu0 0
    %826 = vmatpush1.bf16.msra.mxu0 %v601
    %827 = vmatprep.subr.bf16.mxu0 0
    %828 = vmatpush1.bf16.msra.mxu0 %v602
    %829 = vmatprep.subr.bf16.mxu0 0
    %830 = vmatpush1.bf16.msra.mxu0 %v603
    %831 = vmatprep.subr.bf16.mxu0 0
    %832 = vmatpush1.bf16.msra.mxu0 %v604
    %833 = vmatprep.subr.bf16.mxu0 0
    %834 = vmatpush1.bf16.msra.mxu0 %v605
    %835 = vmatprep.subr.bf16.mxu0 0
    %836 = vmatpush1.bf16.msra.mxu0 %v606
    %837 = vmatprep.subr.bf16.mxu0 0
    %838 = vmatpush1.bf16.msra.mxu0 %v607
    %839 = vmatprep.subr.bf16.mxu0 0
    %840 = vmatpush1.bf16.msra.mxu0 %v608
    %841 = vmatprep.subr.bf16.mxu0 0
    %842 = vmatpush1.bf16.msra.mxu0 %v609
    %843 = vmatprep.subr.bf16.mxu0 0
    %844 = vmatpush1.bf16.msra.mxu0 %v610
    %845 = vmatprep.subr.bf16.mxu0 0
    %846 = vmatpush1.bf16.msra.mxu0 %v611
    %847 = vmatprep.subr.bf16.mxu0 0
    %848 = vmatpush1.bf16.msra.mxu0 %v612
    %849 = vmatprep.subr.bf16.mxu0 0
    %850 = vmatpush1.bf16.msra.mxu0 %v613
    %851 = vmatprep.subr.bf16.mxu0 0
    %852 = vmatpush1.bf16.msra.mxu0 %v614
    %853 = vmatprep.subr.bf16.mxu0 0
    %854 = vmatpush1.bf16.msra.mxu0 %v615
    %855 = vmatprep.subr.bf16.mxu0 0
    %856 = vmatpush1.bf16.msra.mxu0 %v616
    %857 = vmatprep.mubr.bf16.mxu0 %v288
    %858 = vmatmul.mubr.bf16.gmra.mrb[0].mxu0 %v287
    %v859 = vpop.f32.mrb[0].mxu0
    %v860 = vadd.f32 %v812, %v859
    %v861 = vpop.f32.mrb[0].mxu0
    %v862 = vpop.f32.mrb[0].mxu0
    %v863 = vadd.f32 %v815, %v862
    %v864 = vpop.f32.mrb[0].mxu0
    %865 = vmatprep.mubr.bf16.mxu0 %v296
    %866 = vmatmul.mubr.bf16.gmra.mrb[0].mxu0 %v295
    %v867 = vpop.f32.mrb[0].mxu0
    %v868 = vadd.f32 %v820, %v867
    %v869 = vpop.f32.mrb[0].mxu0
    %v870 = vpop.f32.mrb[0].mxu0
    %v871 = vpop.f32.mrb[0].mxu0
    %872 = vdwg.mxu0
    %873 = vmatprep.subr.bf16.mxu0 0
    %874 = vmatpush1.bf16.msra.mxu0 %v553
    %875 = vmatprep.subr.bf16.mxu0 0
    %876 = vmatpush1.bf16.msra.mxu0 %v554
    %877 = vmatprep.subr.bf16.mxu0 0
    %878 = vmatpush1.bf16.msra.mxu0 %v555
    %879 = vmatprep.subr.bf16.mxu0 0
    %880 = vmatpush1.bf16.msra.mxu0 %v556
    %881 = vmatprep.subr.bf16.mxu0 0
    %882 = vmatpush1.bf16.msra.mxu0 %v557
    %883 = vmatprep.subr.bf16.mxu0 0
    %884 = vmatpush1.bf16.msra.mxu0 %v558
    %885 = vmatprep.subr.bf16.mxu0 0
    %886 = vmatpush1.bf16.msra.mxu0 %v559
    %887 = vmatprep.subr.bf16.mxu0 0
    %888 = vmatpush1.bf16.msra.mxu0 %v560
    %889 = vmatprep.subr.bf16.mxu0 0
    %890 = vmatpush1.bf16.msra.mxu0 %v561
    %891 = vmatprep.subr.bf16.mxu0 0
    %892 = vmatpush1.bf16.msra.mxu0 %v562
    %893 = vmatprep.subr.bf16.mxu0 0
    %894 = vmatpush1.bf16.msra.mxu0 %v563
    %895 = vmatprep.subr.bf16.mxu0 0
    %896 = vmatpush1.bf16.msra.mxu0 %v564
    %897 = vmatprep.subr.bf16.mxu0 0
    %898 = vmatpush1.bf16.msra.mxu0 %v565
    %899 = vmatprep.subr.bf16.mxu0 0
    %900 = vmatpush1.bf16.msra.mxu0 %v566
    %901 = vmatprep.subr.bf16.mxu0 0
    %902 = vmatpush1.bf16.msra.mxu0 %v567
    %903 = vmatprep.subr.bf16.mxu0 0
    %904 = vmatpush1.bf16.msra.mxu0 %v568
    %905 = vmatprep.mubr.bf16.mxu0 %v218
    %906 = vmatmul.mubr.bf16.gmra.mrb[0].mxu0 %v217
    %v907 = vpop.f32.mrb[0].mxu0
    %v908 = vadd.f32 %v860, %v907
    %v909 = vpop.f32.mrb[0].mxu0
    %v910 = vpop.f32.mrb[0].mxu0
    %v911 = vadd.f32 %v863, %v910
    %v912 = vpop.f32.mrb[0].mxu0
    %913 = vmatprep.mubr.bf16.mxu0 %v226
    %914 = vmatmul.mubr.bf16.gmra.mrb[0].mxu0 %v225
    %v915 = vpop.f32.mrb[0].mxu0
    %v916 = vadd.f32 %v868, %v915
    %v917 = vpop.f32.mrb[0].mxu0
    %v918 = vpop.f32.mrb[0].mxu0
    %v919 = vpop.f32.mrb[0].mxu0
    %920 = vdwg.mxu0
    %921 = vmatprep.subr.bf16.mxu0 0
    %922 = vmatpush1.bf16.msra.mxu0 %v569
    %923 = vmatprep.subr.bf16.mxu0 0
    %924 = vmatpush1.bf16.msra.mxu0 %v570
    %925 = vmatprep.subr.bf16.mxu0 0
    %926 = vmatpush1.bf16.msra.mxu0 %v571
    %927 = vmatprep.subr.bf16.mxu0 0
    %928 = vmatpush1.bf16.msra.mxu0 %v572
    %929 = vmatprep.subr.bf16.mxu0 0
    %930 = vmatpush1.bf16.msra.mxu0 %v573
    %931 = vmatprep.subr.bf16.mxu0 0
    %932 = vmatpush1.bf16.msra.mxu0 %v574
    %933 = vmatprep.subr.bf16.mxu0 0
    %934 = vmatpush1.bf16.msra.mxu0 %v575
    %935 = vmatprep.subr.bf16.mxu0 0
    %936 = vmatpush1.bf16.msra.mxu0 %v576
    %937 = vmatprep.subr.bf16.mxu0 0
    %938 = vmatpush1.bf16.msra.mxu0 %v577
    %939 = vmatprep.subr.bf16.mxu0 0
    %940 = vmatpush1.bf16.msra.mxu0 %v578
    %941 = vmatprep.subr.bf16.mxu0 0
    %942 = vmatpush1.bf16.msra.mxu0 %v579
    %943 = vmatprep.subr.bf16.mxu0 0
    %944 = vmatpush1.bf16.msra.mxu0 %v580
    %945 = vmatprep.subr.bf16.mxu0 0
    %946 = vmatpush1.bf16.msra.mxu0 %v581
    %947 = vmatprep.subr.bf16.mxu0 0
    %948 = vmatpush1.bf16.msra.mxu0 %v582
    %949 = vmatprep.subr.bf16.mxu0 0
    %950 = vmatpush1.bf16.msra.mxu0 %v583
    %951 = vmatprep.subr.bf16.mxu0 0
    %952 = vmatpush1.bf16.msra.mxu0 %v584
    %953 = vmatprep.mubr.bf16.mxu0 %v220
    %954 = vmatmul.mubr.bf16.gmra.mrb[0].mxu0 %v219
    %v955 = vpop.f32.mrb[0].mxu0
    %v956 = vadd.f32 %v908, %v955
    %v957 = vpop.f32.mrb[0].mxu0
    %v958 = vpop.f32.mrb[0].mxu0
    %v959 = vadd.f32 %v911, %v958
    %v960 = vpop.f32.mrb[0].mxu0
    %961 = vmatprep.mubr.bf16.mxu0 %v228
    %962 = vmatmul.mubr.bf16.gmra.mrb[0].mxu0 %v227
    %v963 = vpop.f32.mrb[0].mxu0
    %v964 = vadd.f32 %v916, %v963
    %v965 = vpop.f32.mrb[0].mxu0
    %v966 = vpop.f32.mrb[0].mxu0
    %v967 = vpop.f32.mrb[0].mxu0
    %968 = vdwg.mxu0
    %969 = vmatprep.subr.bf16.mxu0 0
    %970 = vmatpush1.bf16.msra.mxu0 %v585
    %971 = vmatprep.subr.bf16.mxu0 0
    %972 = vmatpush1.bf16.msra.mxu0 %v586
    %973 = vmatprep.subr.bf16.mxu0 0
    %974 = vmatpush1.bf16.msra.mxu0 %v587
    %975 = vmatprep.subr.bf16.mxu0 0
    %976 = vmatpush1.bf16.msra.mxu0 %v588
    %977 = vmatprep.subr.bf16.mxu0 0
    %978 = vmatpush1.bf16.msra.mxu0 %v589
    %979 = vmatprep.subr.bf16.mxu0 0
    %980 = vmatpush1.bf16.msra.mxu0 %v590
    %981 = vmatprep.subr.bf16.mxu0 0
    %982 = vmatpush1.bf16.msra.mxu0 %v591
    %983 = vmatprep.subr.bf16.mxu0 0
    %984 = vmatpush1.bf16.msra.mxu0 %v592
    %985 = vmatprep.subr.bf16.mxu0 0
    %986 = vmatpush1.bf16.msra.mxu0 %v593
    %987 = vmatprep.subr.bf16.mxu0 0
    %988 = vmatpush1.bf16.msra.mxu0 %v594
    %989 = vmatprep.subr.bf16.mxu0 0
    %990 = vmatpush1.bf16.msra.mxu0 %v595
    %991 = vmatprep.subr.bf16.mxu0 0
    %992 = vmatpush1.bf16.msra.mxu0 %v596
    %993 = vmatprep.subr.bf16.mxu0 0
    %994 = vmatpush1.bf16.msra.mxu0 %v597
    %995 = vmatprep.subr.bf16.mxu0 0
    %996 = vmatpush1.bf16.msra.mxu0 %v598
    %997 = vmatprep.subr.bf16.mxu0 0
    %998 = vmatpush1.bf16.msra.mxu0 %v599
    %999 = vmatprep.subr.bf16.mxu0 0
    %1000 = vmatpush1.bf16.msra.mxu0 %v600
    %1001 = vmatprep.mubr.bf16.mxu0 %v222
    %1002 = vmatmul.mubr.bf16.gmra.mrb[0].mxu0 %v221
    %v1003 = vpop.f32.mrb[0].mxu0
    %v1004 = vadd.f32 %v956, %v1003
    %v1005 = vpop.f32.mrb[0].mxu0
    %v1006 = vpop.f32.mrb[0].mxu0
    %v1007 = vadd.f32 %v959, %v1006
    %v1008 = vpop.f32.mrb[0].mxu0
    %1009 = vmatprep.mubr.bf16.mxu0 %v230
    %1010 = vmatmul.mubr.bf16.gmra.mrb[0].mxu0 %v229
    %v1011 = vpop.f32.mrb[0].mxu0
    %v1012 = vadd.f32 %v964, %v1011
    %v1013 = vpop.f32.mrb[0].mxu0
    %v1014 = vpop.f32.mrb[0].mxu0
    %v1015 = vpop.f32.mrb[0].mxu0
    %1016 = vdwg.mxu0
    %1017 = vmatprep.subr.bf16.mxu0 0
    %1018 = vmatpush1.bf16.msra.mxu0 %v601
    %1019 = vmatprep.subr.bf16.mxu0 0
    %1020 = vmatpush1.bf16.msra.mxu0 %v602
    %1021 = vmatprep.subr.bf16.mxu0 0
    %1022 = vmatpush1.bf16.msra.mxu0 %v603
    %1023 = vmatprep.subr.bf16.mxu0 0
    %1024 = vmatpush1.bf16.msra.mxu0 %v604
    %1025 = vmatprep.subr.bf16.mxu0 0
    %1026 = vmatpush1.bf16.msra.mxu0 %v605
    %1027 = vmatprep.subr.bf16.mxu0 0
    %1028 = vmatpush1.bf16.msra.mxu0 %v606
    %1029 = vmatprep.subr.bf16.mxu0 0
    %1030 = vmatpush1.bf16.msra.mxu0 %v607
    %1031 = vmatprep.subr.bf16.mxu0 0
    %1032 = vmatpush1.bf16.msra.mxu0 %v608
    %1033 = vmatprep.subr.bf16.mxu0 0
    %1034 = vmatpush1.bf16.msra.mxu0 %v609
    %1035 = vmatprep.subr.bf16.mxu0 0
    %1036 = vmatpush1.bf16.msra.mxu0 %v610
    %1037 = vmatprep.subr.bf16.mxu0 0
    %1038 = vmatpush1.bf16.msra.mxu0 %v611
    %1039 = vmatprep.subr.bf16.mxu0 0
    %1040 = vmatpush1.bf16.msra.mxu0 %v612
    %1041 = vmatprep.subr.bf16.mxu0 0
    %1042 = vmatpush1.bf16.msra.mxu0 %v613
    %1043 = vmatprep.subr.bf16.mxu0 0
    %1044 = vmatpush1.bf16.msra.mxu0 %v614
    %1045 = vmatprep.subr.bf16.mxu0 0
    %1046 = vmatpush1.bf16.msra.mxu0 %v615
    %1047 = vmatprep.subr.bf16.mxu0 0
    %1048 = vmatpush1.bf16.msra.mxu0 %v616
    %1049 = vmatprep.mubr.bf16.mxu0 %v224
    %1050 = vmatmul.mubr.bf16.gmra.mrb[0].mxu0 %v223
    %v1051 = vpop.f32.mrb[0].mxu0
    %v1052 = vadd.f32 %v1004, %v1051
    %v1053 = vpop.f32.mrb[0].mxu0
    %v1054 = vpop.f32.mrb[0].mxu0
    %v1055 = vadd.f32 %v1007, %v1054
    %v1056 = vpop.f32.mrb[0].mxu0
    %1057 = vmatprep.mubr.bf16.mxu0 %v232
    %1058 = vmatmul.mubr.bf16.gmra.mrb[0].mxu0 %v231
    %v1059 = vpop.f32.mrb[0].mxu0
    %v1060 = vadd.f32 %v1012, %v1059
    %v1061 = vpop.f32.mrb[0].mxu0
    %v1062 = vpop.f32.mrb[0].mxu0
    %v1063 = vpop.f32.mrb[0].mxu0
    %1064 = vdwg.mxu0
    %v1065 = vrsqrt.pop %v1052
    %v1066 = vmul.f32 %v1052, %v1065
    %vm1067 = vcmp.eq.f32.partialorder %v1052, inf
    %v1068 = vsel %vm1067, %v1052, %v1066
    %vm1069 = vcmp.eq.f32.partialorder %v1052, 0.0
    %v1070 = vand.u32 %v1052, 2147483648
    %v1071 = vsel %vm1069, %v1070, %v1068
    %v1072 = vrsqrt.pop %v1055
    %v1073 = vmul.f32 %v1055, %v1072
    %vm1074 = vcmp.eq.f32.partialorder %v1055, inf
    %v1075 = vsel %vm1074, %v1055, %v1073
    %vm1076 = vcmp.eq.f32.partialorder %v1055, 0.0
    %v1077 = vand.u32 %v1055, 2147483648
    %v1078 = vsel %vm1076, %v1077, %v1075
    %v1079 = vrsqrt.pop %v1060
    %v1080 = vmul.f32 %v1060, %v1079
    %vm1081 = vcmp.eq.f32.partialorder %v1060, inf
    %v1082 = vsel %vm1081, %v1060, %v1080
    %vm1083 = vcmp.eq.f32.partialorder %v1060, 0.0
    %v1084 = vand.u32 %v1060, 2147483648
    %v1085 = vsel %vm1083, %v1084, %v1082
    %1086 = vst [vmem:[#allocation7] sm:$0xff] %v1071
    %1087 = vst [vmem:[#allocation7 + $0x8] sm:$0xff] %v1078
    %1088 = vst [vmem:[#allocation7 + $0x10] sm:$0x3] %v1085
    // Predicated region
    $region18: #{tpu_custom_call.1} parent=1 // pred_check
      _
    $region19: #{tpu_custom_call.1} parent=1 // pred_check_branch
      %1090 = sbr.rel (0) target = $region21
    $region20: #{tpu_custom_call.1} parent=1 // pred_region
      %s1092 = ssub.s32 384, 384
      %1093 = vsyncadd [#allocation4], %s1092
      %s1094 = sshll.u32 [#allocation7], 4
      %s1095 = int_to_ptr.vmem [resolvable:$true] %s1094
      %1100 = dma.vmem_to_hbm [thread:$0]  %s1095, 384, %s2, [#allocation4], 128, 128, 8
    $region21: #{tpu_custom_call.1} parent=1 // pred_fallthru
      _
    // Predicated region
    $region22: #{tpu_custom_call.1} parent=1 // pred_check
      _
    $region23: #{tpu_custom_call.1} parent=1 // pred_check_branch
      %1102 = sbr.rel (0) target = $region25
    $region24: #{tpu_custom_call.1} parent=1 // pred_region
      %1103 = dma.done [#allocation4], 384
    $region25: #{tpu_custom_call.1} parent=1 // pred_fallthru
      _
    %1104 = vsyncpa [#allocation3], 1
    %1105 = vsyncpa [#allocation6], 1
    %1106 = vsyncpa [#allocation4], 1

</llo_original>
